<compile_context>
chip_gen: v7x
topology: tpu7x:2x2x1
jax: 0.10.0
libtpu: 0.0.40
codegen_flags: <defaults>
</compile_context>

<pallas_src>
import math

import jax
import jax.numpy as jnp
from jax.experimental import pallas as pl
from jax.experimental.pallas import tpu as pltpu

_MiB = 1024 * 1024


def _round_up(a, b):
    return ((a + b - 1) // b) * b


def _vmem_capacity_bytes():
    """Physical VMEM per TensorCore (128 MiB on v5e/v6e, 64 MiB on v7x)."""
    try:
        cap = getattr(pltpu.get_tpu_info(), "vmem_capacity_bytes", None)
        if cap:
            return int(cap)
    except Exception:
        pass
    return 64 * _MiB  # conservative (v7x-sized) fallback


def _make_ffn_kernel(dk, single_k):
    if single_k:
        # Whole dMid in one shot: no accumulator, write straight to the output.
        def kernel(x_ref, w1_ref, b1_ref, w2_ref, b2_ref, o_ref):
            h = jnp.dot(x_ref[...], w1_ref[...],
                        preferred_element_type=jnp.float32)
            h = jnp.maximum(h + b1_ref[...], 0.0)          # bias + ReLU in f32
            # dropout with p=0 is the identity -> nothing to do
            w2 = w2_ref[...]
            y = jnp.dot(h.astype(w2.dtype), w2,
                        preferred_element_type=jnp.float32)
            o_ref[...] = (y + b2_ref[...]).astype(o_ref.dtype)

        return kernel

    def kernel(x_ref, w1_ref, b1_ref, w2_ref, b2_ref, o_ref, acc_ref):
        # Grid: (row tiles, dMid chunks).  Per step:
        #   x_ref: (tm, M)  w1_ref: (M, dk)  b1_ref: (1, dMid_pad) resident
        #   w2_ref: (dk, M) b2_ref: (1, M)   o_ref: (tm, M)  acc_ref: (tm, M) f32
        k = pl.program_id(1)
        start = pl.multiple_of(k * dk, 128)                # dk is a multiple of 128
        b1c = b1_ref[:, pl.ds(start, dk)]

        h = jnp.dot(x_ref[...], w1_ref[...],
                    preferred_element_type=jnp.float32)
        h = jnp.maximum(h + b1c, 0.0)                      # bias + ReLU in f32
        w2 = w2_ref[...]
        part = jnp.dot(h.astype(w2.dtype), w2,
                       preferred_element_type=jnp.float32)

        @pl.when(k == 0)
        def _():
            acc_ref[...] = part                            # no separate zero-init pass

        @pl.when(k > 0)
        def _():
            acc_ref[...] += part

        @pl.when(k == pl.num_programs(1) - 1)
        def _():
            o_ref[...] = (acc_ref[...] + b2_ref[...]).astype(o_ref.dtype)

    return kernel


def feedforward(x, w1, b1, w2, b2, *, tm=None, dk=None, matmul_dtype=jnp.bfloat16):
    """x: (..., M) -> (..., M), matching PyTorch FeedForward.forward (p=0).

    w1: (M, dMid), w2: (dMid, M)  (pre-transposed from PyTorch's (out, in)).
    matmul_dtype: dtype of the MXU operands (default bfloat16); accumulation,
      bias adds and ReLU always stay in f32.
    """
    orig_shape = x.shape
    M = int(orig_shape[-1])
    dMid = int(w1.shape[1])
    out_dtype = x.dtype

    x2d = x.reshape(-1, M)
    n = int(x2d.shape[0])

    mm_dtype = jnp.dtype(x.dtype if matmul_dtype is None else matmul_dtype)
    mm_b = mm_dtype.itemsize
    o_b = jnp.dtype(out_dtype).itemsize

    # Hoisted operand casts (no per-step x cast in-kernel; halves x DMA for bf16).
    x2d = x2d.astype(mm_dtype)
    w1 = w1.astype(mm_dtype)
    w2 = w2.astype(mm_dtype)
    b1_2d = b1.reshape(1, dMid).astype(jnp.float32)
    b2_2d = b2.reshape(1, M).astype(jnp.float32)

    sublane = 16 if mm_b == 2 else 8

    # ---- generation-aware VMEM budget / core count --------------------------
    phys_vmem = _vmem_capacity_bytes()
    if phys_vmem >= 96 * _MiB:          # v5e / v6e: 128 MiB physical, 1 TC
        vmem_budget = min(phys_vmem - 20 * _MiB, 108 * _MiB)
        two_cores = False
    else:                               # v7x: 64 MiB physical, 2 TCs
        vmem_budget = max(phys_vmem - 12 * _MiB, 32 * _MiB)
        two_cores = True

    # ---- row tile ------------------------------------------------------------
    n_pad = _round_up(n, sublane)
    if tm is None:
        tm = 1024                       # clears the ~680 flop/byte v6e ridge
    tm = max(sublane, min(tm, n_pad))
    if two_cores and n_pad >= 2 * sublane:
        # Keep >= 2 row tiles so dimension_semantics=("parallel",...) can use both TCs.
        tm = min(tm, _round_up(-(-n // 2), sublane))

    def footprint(tm_, dk_, tiled):
        w_bytes = 2 * 2 * M * dk_ * mm_b                    # W1+W2, double-buffered
        b_bytes = (dMid if tiled else dk_) * 4 + 2 * M * 4
        x_bytes = 2 * tm_ * M * mm_b
        o_bytes = 2 * tm_ * M * o_b
        acc_bytes = tm_ * M * 4 if tiled else 0
        h_bytes = tm_ * dk_ * 4 + tm_ * dk_ * mm_b          # f32 h + mm_dtype copy
        return w_bytes + b_bytes + x_bytes + o_bytes + acc_bytes + h_bytes + 4 * _MiB

    # ---- dMid tiling ----------------------------------------------------------
    if dk is None:
        if footprint(tm, dMid, tiled=False) <= vmem_budget:
            dk = dMid                   # weights fully VMEM-resident: one HBM pass
        else:
            dk = 2048
            while dk > 256 and footprint(tm, dk, tiled=True) > vmem_budget:
                dk //= 2

    if dk >= dMid:
        dk, dMid_pad = dMid, dMid
    else:
        dk = max(128, _round_up(dk, 128))
        dMid_pad = _round_up(dMid, dk)
        if dMid_pad == dk:
            dk, dMid_pad = dMid, dMid

    single_k = dk == dMid_pad
    # Last resort: shrink the row tile until the footprint fits the budget.
    while tm > sublane and footprint(tm, dk, tiled=not single_k) > vmem_budget:
        tm = _round_up(max(tm // 2, sublane), sublane)

    if dMid_pad != dMid:
        # Zero padding along dMid is exact: padded W1 columns / b1 entries give
        # h == relu(0) == 0 and padded W2 rows are zero -> tail contributes 0.
        pad = dMid_pad - dMid
        w1 = jnp.pad(w1, ((0, 0), (0, pad)))
        w2 = jnp.pad(w2, ((0, pad), (0, 0)))
        b1_2d = jnp.pad(b1_2d, ((0, 0), (0, pad)))

    grid_m = pl.cdiv(n, tm)             # partial edge row block handled by Pallas
    grid_k = dMid_pad // dk
    grid = (grid_m, grid_k)

    if single_k:
        in_specs = [
            pl.BlockSpec((tm, M), lambda i, k: (i, 0)),         # x rows
            pl.BlockSpec((M, dMid_pad), lambda i, k: (0, 0)),   # W1 resident
            pl.BlockSpec((1, dMid_pad), lambda i, k: (0, 0)),   # b1 resident
            pl.BlockSpec((dMid_pad, M), lambda i, k: (0, 0)),   # W2 resident
            pl.BlockSpec((1, M), lambda i, k: (0, 0)),          # b2 resident
        ]
        scratch = []
    else:
        in_specs = [
            pl.BlockSpec((tm, M), lambda i, k: (i, 0)),         # x rows (reused over k)
            pl.BlockSpec((M, dk), lambda i, k: (0, k)),         # W1 column chunk
            pl.BlockSpec((1, dMid_pad), lambda i, k: (0, 0)),   # b1 resident (sliced in-kernel)
            pl.BlockSpec((dk, M), lambda i, k: (k, 0)),         # W2 row chunk
            pl.BlockSpec((1, M), lambda i, k: (0, 0)),          # b2 resident
        ]
        scratch = [pltpu.VMEM((tm, M), jnp.float32)]

    # Truthful HBM byte count: weights are re-streamed once per row tile when tiled.
    weight_passes = 1 if single_k else grid_m
    cost = pl.CostEstimate(
        flops=4 * n * M * dMid,          # two matmuls, 2*n*M*dMid each
        transcendentals=0,
        bytes_accessed=int(n * M * (mm_b + o_b)
                           + weight_passes * 2 * M * dMid_pad * mm_b
                           + (dMid_pad + M) * 4),
    )

    out = pl.pallas_call(
        _make_ffn_kernel(dk, single_k),
        out_shape=jax.ShapeDtypeStruct((n, M), out_dtype),
        grid_spec=pltpu.PrefetchScalarGridSpec(
            num_scalar_prefetch=0,
            grid=grid,
            in_specs=in_specs,
            out_specs=pl.BlockSpec((tm, M), lambda i, k: (i, 0)),
            scratch_shapes=scratch,
        ),
        compiler_params=pltpu.CompilerParams(
            dimension_semantics=("parallel", "arbitrary"),
            vmem_limit_bytes=int(vmem_budget),
        ),
        cost_estimate=cost,
    )(x2d, w1, b1_2d, w2, b2_2d)

    return out.reshape(orig_shape)


def init_params(key, M, dropout=0.0, dtype=jnp.float32):
    """Deterministic init matching PyTorch nn.Linear default U(-1/sqrt(fan_in), +)."""
    dMid = int(1.0 / (1.0 - dropout)) * M
    k1, k2, k3, k4 = jax.random.split(key, 4)
    bound1 = 1.0 / math.sqrt(M)
    bound2 = 1.0 / math.sqrt(dMid)
    # Stored already transposed: (in, out).
    w1 = jax.random.uniform(k1, (M, dMid), dtype, -bound1, bound1)
    b1 = jax.random.uniform(k2, (dMid,), dtype, -bound1, bound1)
    w2 = jax.random.uniform(k3, (dMid, M), dtype, -bound2, bound2)
    b2 = jax.random.uniform(k4, (M,), dtype, -bound2, bound2)
    return w1, b1, w2, b2


if __name__ == "__main__":
    key = jax.random.PRNGKey(0)
    M = 128         # lane-dense feature size (multiple of 128)
    B, S = 2, 8     # batch, sequence -> 16 rows
    dropout = 0.0   # -> dMid = M; Dropout(p=0) is the identity
    # TODO(synk): dropout with p > 0 in training mode would need an in-kernel
    # pltpu.prng_random_bits mask; the module's default (p=0 / eval) is identity.

    kx, kp = jax.random.split(key)
    x = jax.random.normal(kx, (B, S, M), jnp.float32)
    w1, b1, w2, b2 = init_params(kp, M, dropout)

    y = jax.block_until_ready(feedforward(x, w1, b1, w2, b2))

    # Pure-JAX reference emulating the kernel's bf16 MXU operands + f32 accumulation.
    hp = jax.lax.Precision.HIGHEST
    bf = lambda a: a.astype(jnp.bfloat16).astype(jnp.float32)
    h_ref = jnp.maximum(jnp.dot(bf(x), bf(w1), precision=hp) + b1, 0.0)
    ref = jnp.dot(bf(h_ref), bf(w2), precision=hp) + b2

    assert y.shape == x.shape
    assert y.dtype == x.dtype
    assert jnp.allclose(y, ref, atol=1e-2, rtol=1e-2), float(jnp.max(jnp.abs(y - ref)))

    print("KERNEL_OK")
</pallas_src>

<mosaic_0001>
module attributes {stable_mosaic.version = 11 : i64} {
  func.func @kernel(%arg0: i32, %arg1: i32, %arg2: memref<16x128xbf16, #tpu.memory_space<vmem>>, %arg3: memref<128x128xbf16, #tpu.memory_space<vmem>>, %arg4: memref<1x128xf32, #tpu.memory_space<vmem>>, %arg5: memref<128x128xbf16, #tpu.memory_space<vmem>>, %arg6: memref<1x128xf32, #tpu.memory_space<vmem>>, %arg7: memref<16x128xf32, #tpu.memory_space<vmem>>) attributes {dimension_semantics = [#tpu.dimension_semantics<parallel>, #tpu.dimension_semantics<arbitrary>], iteration_bounds = array<i64: 1, 1>, scalar_prefetch = 0 : i64, scratch_operands = 0 : i64, tpu.core_type = #tpu.core_type<tc>, window_params = [{transform_indices = @transform_0, window_bounds = array<i64: 16, 128>}, {pipeline_mode = #tpu.pipeline_mode<synchronous>, transform_indices = @transform_1, window_bounds = array<i64: 128, 128>}, {pipeline_mode = #tpu.pipeline_mode<synchronous>, transform_indices = @transform_2, window_bounds = array<i64: 1, 128>}, {pipeline_mode = #tpu.pipeline_mode<synchronous>, transform_indices = @transform_3, window_bounds = array<i64: 128, 128>}, {pipeline_mode = #tpu.pipeline_mode<synchronous>, transform_indices = @transform_4, window_bounds = array<i64: 1, 128>}, {transform_indices = @transform_5, window_bounds = array<i64: 16, 128>}]} {
    %c0 = arith.constant 0 : index
    %c0_0 = arith.constant 0 : index
    %0 = vector.load %arg2[%c0, %c0_0] : memref<16x128xbf16, #tpu.memory_space<vmem>>, vector<16x128xbf16>
    %c0_1 = arith.constant 0 : index
    %c0_2 = arith.constant 0 : index
    %1 = vector.load %arg3[%c0_1, %c0_2] : memref<128x128xbf16, #tpu.memory_space<vmem>>, vector<128x128xbf16>
    %cst = arith.constant dense<0.000000e+00> : vector<16x128xf32>
    %2 = tpu.matmul %0, %1, %cst {dimension_numbers = #tpu.dot_dimension_numbers<[1], [0], [0], [1], [0, 0, 1, 1], [], []>} : vector<16x128xbf16>, vector<128x128xbf16>, vector<16x128xf32> -> vector<16x128xf32>
    %c0_3 = arith.constant 0 : index
    %c0_4 = arith.constant 0 : index
    %3 = vector.load %arg4[%c0_3, %c0_4] : memref<1x128xf32, #tpu.memory_space<vmem>>, vector<1x128xf32>
    %4 = vector.broadcast %3 : vector<1x128xf32> to vector<16x128xf32>
    %5 = arith.addf %2, %4 : vector<16x128xf32>
    %cst_5 = arith.constant 0.000000e+00 : f32
    %6 = vector.broadcast %cst_5 : f32 to vector<16x128xf32>
    %7 = arith.maximumf %5, %6 : vector<16x128xf32>
    %c0_6 = arith.constant 0 : index
    %c0_7 = arith.constant 0 : index
    %8 = vector.load %arg5[%c0_6, %c0_7] : memref<128x128xbf16, #tpu.memory_space<vmem>>, vector<128x128xbf16>
    %9 = arith.truncf %7 : vector<16x128xf32> to vector<16x128xbf16>
    %cst_8 = arith.constant dense<0.000000e+00> : vector<16x128xf32>
    %10 = tpu.matmul %9, %8, %cst_8 {dimension_numbers = #tpu.dot_dimension_numbers<[1], [0], [0], [1], [0, 0, 1, 1], [], []>} : vector<16x128xbf16>, vector<128x128xbf16>, vector<16x128xf32> -> vector<16x128xf32>
    %c0_9 = arith.constant 0 : index
    %c0_10 = arith.constant 0 : index
    %11 = vector.load %arg6[%c0_9, %c0_10] : memref<1x128xf32, #tpu.memory_space<vmem>>, vector<1x128xf32>
    %12 = vector.broadcast %11 : vector<1x128xf32> to vector<16x128xf32>
    %13 = arith.addf %10, %12 : vector<16x128xf32>
    %c0_11 = arith.constant 0 : index
    %c0_12 = arith.constant 0 : index
    %14 = vector.load %arg7[%c0_11, %c0_12] : memref<16x128xf32, #tpu.memory_space<vmem>>, vector<16x128xf32>
    tpu.vector_store %arg7[%c0_11, %c0_12], %13 {strides = array<i32>} : memref<16x128xf32, #tpu.memory_space<vmem>>, vector<16x128xf32>,
    return
  }
  func.func @transform_0(%arg0: i32, %arg1: i32) -> (i32, i32) {
    %c0_i32 = arith.constant 0 : i32
    %c0_i32_0 = arith.constant 0 : i32
    return %arg0, %c0_i32 : i32, i32
  }
  func.func @transform_1(%arg0: i32, %arg1: i32) -> (i32, i32) {
    %c0_i32 = arith.constant 0 : i32
    %c0_i32_0 = arith.constant 0 : i32
    %c0_i32_1 = arith.constant 0 : i32
    return %c0_i32, %c0_i32_0 : i32, i32
  }
  func.func @transform_2(%arg0: i32, %arg1: i32) -> (i32, i32) {
    %c0_i32 = arith.constant 0 : i32
    %c0_i32_0 = arith.constant 0 : i32
    %c0_i32_1 = arith.constant 0 : i32
    return %c0_i32, %c0_i32_0 : i32, i32
  }
  func.func @transform_3(%arg0: i32, %arg1: i32) -> (i32, i32) {
    %c0_i32 = arith.constant 0 : i32
    %c0_i32_0 = arith.constant 0 : i32
    %c0_i32_1 = arith.constant 0 : i32
    return %c0_i32, %c0_i32_0 : i32, i32
  }
  func.func @transform_4(%arg0: i32, %arg1: i32) -> (i32, i32) {
    %c0_i32 = arith.constant 0 : i32
    %c0_i32_0 = arith.constant 0 : i32
    %c0_i32_1 = arith.constant 0 : i32
    return %c0_i32, %c0_i32_0 : i32, i32
  }
  func.func @transform_5(%arg0: i32, %arg1: i32) -> (i32, i32) {
    %c0_i32 = arith.constant 0 : i32
    %c0_i32_0 = arith.constant 0 : i32
    return %arg0, %c0_i32 : i32, i32
  }
}

</mosaic_0001>

<llo_original>
// kernel: tpu_custom_call.1
$region0: #{tpu_custom_call.1}
  #allocation0 [shape = 'u32[]', space=smem, size = 0x4, offset = 0x4, fixed_abs, tag = 'smem constant byte address 0x4 - core index']
  #allocation1 [shape = 'u32[144,128]{1,0:T(1,128)}', space=vmem, size = 0x12000, scoped, tag = 'internal scratch']
  %s0 = inlined_call_operand.hbm [shape: bf16[16,128], index: 0, kind: input, shape index: {}]
  %s1 = inlined_call_operand.hbm [shape: bf16[128,128], index: 1, kind: input, shape index: {}]
  %s2 = inlined_call_operand.vmem [shape: f32[1,128], index: 2, kind: input, shape index: {}]
  %s3 = inlined_call_operand.hbm [shape: bf16[128,128], index: 3, kind: input, shape index: {}]
  %s4 = inlined_call_operand.vmem [shape: f32[1,128], index: 4, kind: input, shape index: {}]
  %s5 = inlined_call_operand.hbm [shape: f32[16,128], index: 5, kind: output, shape index: {}]
  %s6 = sld [smem:[#allocation0]]
  $region42: #{tpu_custom_call.1} parent=0
    _
  %s8 = ssub.s32 1, %s6
  %s9 = scalar_select 0, %s8, %s6
  $region1: #{tpu_custom_call.1} parent=0
    #allocation2 [shape = 'u8[4096]{0}', space=vmem, size = 0x1000, scoped, tag = 'input window, operand 0, single buffered']
    #allocation3 [shape = 's32[1]{0}', space=sflag, size = 0x4, scoped, tag = 'scoped memory for tpu_custom_call.1']
    #allocation4 [shape = 's32[1]{0}', space=sflag, size = 0x4, scoped, tag = 'scoped memory for tpu_custom_call.1']
    #allocation5 [shape = 'u8[32768]{0}', space=vmem, size = 0x8000, scoped, tag = 'input window, operand 1, single buffered']
    #allocation6 [shape = 's32[1]{0}', space=sflag, size = 0x4, scoped, tag = 'scoped memory for tpu_custom_call.1']
    #allocation7 [shape = 'u8[32768]{0}', space=vmem, size = 0x8000, scoped, tag = 'input window, operand 3, single buffered']
    #allocation8 [shape = 'u8[8192]{0}', space=vmem, size = 0x2000, scoped, tag = 'output window, operand 0, single buffered']
    %10 = vsyncpa [#allocation3], 0
    %11 = vsyncpa [#allocation6], 0
    %12 = vsyncpa [#allocation4], 0
    // Predicated region
    $region2: #{tpu_custom_call.1} parent=1 // pred_check
      _
    $region3: #{tpu_custom_call.1} parent=1 // pred_check_branch
      %14 = sbr.rel (0) target = $region5
    $region4: #{tpu_custom_call.1} parent=1 // pred_region
      %s16 = ssub.s32 128, 128
      %17 = vsyncadd [#allocation3], %s16
      %s18 = sshll.u32 [#allocation2], 4
      %s19 = int_to_ptr.vmem [resolvable:$true] %s18
      %24 = dma.hbm_to_vmem [thread:$0]  %s0, 128, %s19, [#allocation3], 64, 64, 4
    $region5: #{tpu_custom_call.1} parent=1 // pred_fallthru
      _
    // Predicated region
    $region6: #{tpu_custom_call.1} parent=1 // pred_check
      _
    $region7: #{tpu_custom_call.1} parent=1 // pred_check_branch
      %26 = sbr.rel (0) target = $region9
    $region8: #{tpu_custom_call.1} parent=1 // pred_region
      %s28 = ssub.s32 1024, 1024
      %29 = vsyncadd [#allocation6], %s28
      %s30 = sshll.u32 [#allocation5], 4
      %s31 = int_to_ptr.vmem [resolvable:$true] %s30
      %36 = dma.hbm_to_vmem [thread:$0]  %s1, 1024, %s31, [#allocation6], 64, 64, 4
    $region9: #{tpu_custom_call.1} parent=1 // pred_fallthru
      _
    // Predicated region
    $region10: #{tpu_custom_call.1} parent=1 // pred_check
      _
    $region11: #{tpu_custom_call.1} parent=1 // pred_check_branch
      %38 = sbr.rel (0) target = $region13
    $region12: #{tpu_custom_call.1} parent=1 // pred_region
      _
    $region13: #{tpu_custom_call.1} parent=1 // pred_fallthru
      _
    // Predicated region
    $region14: #{tpu_custom_call.1} parent=1 // pred_check
      _
    $region15: #{tpu_custom_call.1} parent=1 // pred_check_branch
      %40 = sbr.rel (0) target = $region17
    $region16: #{tpu_custom_call.1} parent=1 // pred_region
      %s42 = ssub.s32 1024, 1024
      %43 = vsyncadd [#allocation6], %s42
      %s44 = sshll.u32 [#allocation7], 4
      %s45 = int_to_ptr.vmem [resolvable:$true] %s44
      %50 = dma.hbm_to_vmem [thread:$0]  %s3, 1024, %s45, [#allocation6], 64, 64, 4
    $region17: #{tpu_custom_call.1} parent=1 // pred_fallthru
      _
    // Predicated region
    $region18: #{tpu_custom_call.1} parent=1 // pred_check
      _
    $region19: #{tpu_custom_call.1} parent=1 // pred_check_branch
      %52 = sbr.rel (0) target = $region21
    $region20: #{tpu_custom_call.1} parent=1 // pred_region
      _
    $region21: #{tpu_custom_call.1} parent=1 // pred_fallthru
      _
    // Predicated region
    $region22: #{tpu_custom_call.1} parent=1 // pred_check
      _
    $region23: #{tpu_custom_call.1} parent=1 // pred_check_branch
      %54 = sbr.rel (0) target = $region25
    $region24: #{tpu_custom_call.1} parent=1 // pred_region
      %55 = dma.done [#allocation3], 128
    $region25: #{tpu_custom_call.1} parent=1 // pred_fallthru
      _
    // Predicated region
    $region26: #{tpu_custom_call.1} parent=1 // pred_check
      _
    $region27: #{tpu_custom_call.1} parent=1 // pred_check_branch
      %57 = sbr.rel (0) target = $region29
    $region28: #{tpu_custom_call.1} parent=1 // pred_region
      %58 = dma.done [#allocation6], 1024
    $region29: #{tpu_custom_call.1} parent=1 // pred_fallthru
      _
    // Predicated region
    $region30: #{tpu_custom_call.1} parent=1 // pred_check
      _
    $region31: #{tpu_custom_call.1} parent=1 // pred_check_branch
      %60 = sbr.rel (0) target = $region33
    $region32: #{tpu_custom_call.1} parent=1 // pred_region
      %61 = dma.done [#allocation6], 1024
    $region33: #{tpu_custom_call.1} parent=1 // pred_fallthru
      _
    %v63 = vld [vmem:[#allocation2] sm:$0xf]
    %v64 = vld [vmem:[#allocation2 + $0x4] sm:$0xf]
    %v65 = vld [vmem:[#allocation5] sm:$0xf]
    %v66 = vld [vmem:[#allocation5 + $0x4] sm:$0xf]
    %v67 = vld [vmem:[#allocation5 + $0x8] sm:$0xf]
    %v68 = vld [vmem:[#allocation5 + $0xc] sm:$0xf]
    %v69 = vld [vmem:[#allocation5 + $0x10] sm:$0xf]
    %v70 = vld [vmem:[#allocation5 + $0x14] sm:$0xf]
    %v71 = vld [vmem:[#allocation5 + $0x18] sm:$0xf]
    %v72 = vld [vmem:[#allocation5 + $0x1c] sm:$0xf]
    %v73 = vld [vmem:[#allocation5 + $0x20] sm:$0xf]
    %v74 = vld [vmem:[#allocation5 + $0x24] sm:$0xf]
    %v75 = vld [vmem:[#allocation5 + $0x28] sm:$0xf]
    %v76 = vld [vmem:[#allocation5 + $0x2c] sm:$0xf]
    %v77 = vld [vmem:[#allocation5 + $0x30] sm:$0xf]
    %v78 = vld [vmem:[#allocation5 + $0x34] sm:$0xf]
    %v79 = vld [vmem:[#allocation5 + $0x38] sm:$0xf]
    %v80 = vld [vmem:[#allocation5 + $0x3c] sm:$0xf]
    %v81 = vld [vmem:[%s2] sm:$0x1]
    %v83 = vlaneseq
    %v84 = vshrl.u32 %v83, 7
    %v85 = vsub.s32 0, %v84
    %v86 = vrot.slane %v81, %v85
    %v90 = vunpack.c.l.b16 %v63
    %v91 = vunpack.c.l.b16 %v64
    %v92 = vpack.c.b16 %v91, %v90
    %v110 = vunpack.c.l.b16 %v65
    %v111 = vunpack.c.l.b16 %v66
    %v112 = vunpack.c.l.b16 %v67
    %v113 = vunpack.c.l.b16 %v68
    %v114 = vunpack.c.l.b16 %v69
    %v115 = vunpack.c.l.b16 %v70
    %v116 = vunpack.c.l.b16 %v71
    %v117 = vunpack.c.l.b16 %v72
    %v118 = vunpack.c.l.b16 %v73
    %v119 = vunpack.c.l.b16 %v74
    %v120 = vunpack.c.l.b16 %v75
    %v121 = vunpack.c.l.b16 %v76
    %v122 = vunpack.c.l.b16 %v77
    %v123 = vunpack.c.l.b16 %v78
    %v124 = vunpack.c.l.b16 %v79
    %v125 = vunpack.c.l.b16 %v80
    %v126 = vpack.c.b16 %v111, %v110
    %v127 = vpack.c.b16 %v113, %v112
    %v128 = vpack.c.b16 %v115, %v114
    %v129 = vpack.c.b16 %v117, %v116
    %v130 = vpack.c.b16 %v119, %v118
    %v131 = vpack.c.b16 %v121, %v120
    %v132 = vpack.c.b16 %v123, %v122
    %v133 = vpack.c.b16 %v125, %v124
    %142 = vmatprep.subr.bf16.mxu0 0
    %143 = vmatpush1.bf16.msra.mxu0 %v126
    %144 = vmatprep.subr.bf16.mxu0 0
    %145 = vmatpush1.bf16.msra.mxu0 %v127
    %146 = vmatprep.subr.bf16.mxu0 0
    %147 = vmatpush1.bf16.msra.mxu0 %v128
    %148 = vmatprep.subr.bf16.mxu0 0
    %149 = vmatpush1.bf16.msra.mxu0 %v129
    %150 = vmatprep.subr.bf16.mxu0 0
    %151 = vmatpush1.bf16.msra.mxu0 %v130
    %152 = vmatprep.subr.bf16.mxu0 0
    %153 = vmatpush1.bf16.msra.mxu0 %v131
    %154 = vmatprep.subr.bf16.mxu0 0
    %155 = vmatpush1.bf16.msra.mxu0 %v132
    %156 = vmatprep.subr.bf16.mxu0 0
    %157 = vmatpush1.bf16.msra.mxu0 %v133
    %158 = vmatprep.subr.bf16.mxu0 0
    %159 = vmatpush1.bf16.msra.mxu0 0
    %160 = vmatprep.subr.bf16.mxu0 0
    %161 = vmatpush1.bf16.msra.mxu0 0
    %162 = vmatprep.subr.bf16.mxu0 0
    %163 = vmatpush1.bf16.msra.mxu0 0
    %164 = vmatprep.subr.bf16.mxu0 0
    %165 = vmatpush1.bf16.msra.mxu0 0
    %166 = vmatprep.subr.bf16.mxu0 0
    %167 = vmatpush1.bf16.msra.mxu0 0
    %168 = vmatprep.subr.bf16.mxu0 0
    %169 = vmatpush1.bf16.msra.mxu0 0
    %170 = vmatprep.subr.bf16.mxu0 0
    %171 = vmatpush1.bf16.msra.mxu0 0
    %172 = vmatprep.subr.bf16.mxu0 0
    %173 = vmatpush1.bf16.msra.mxu0 0
    %174 = vmatprep.mubr.bf16.mxu0 0
    %175 = vmatmul.mubr.bf16.gmra.mrb[0].mxu0 %v92
    %v176 = vpop.f32.mrb[0].mxu0
    %v177 = vadd.f32 %v86, %v176
    %v178 = vpop.f32.mrb[0].mxu0
    %v179 = vpop.f32.mrb[0].mxu0
    %v180 = vadd.f32 %v86, %v179
    %v181 = vpop.f32.mrb[0].mxu0
    %182 = vdwg.mxu0
    %v183 = vmax.f32 %v177, 0.0
    %v184 = vmax.f32 %v180, 0.0
    %v185 = vld [vmem:[#allocation7] sm:$0xf]
    %v186 = vld [vmem:[#allocation7 + $0x4] sm:$0xf]
    %v187 = vld [vmem:[#allocation7 + $0x8] sm:$0xf]
    %v188 = vld [vmem:[#allocation7 + $0xc] sm:$0xf]
    %v189 = vld [vmem:[#allocation7 + $0x10] sm:$0xf]
    %v190 = vld [vmem:[#allocation7 + $0x14] sm:$0xf]
    %v191 = vld [vmem:[#allocation7 + $0x18] sm:$0xf]
    %v192 = vld [vmem:[#allocation7 + $0x1c] sm:$0xf]
    %v193 = vld [vmem:[#allocation7 + $0x20] sm:$0xf]
    %v194 = vld [vmem:[#allocation7 + $0x24] sm:$0xf]
    %v195 = vld [vmem:[#allocation7 + $0x28] sm:$0xf]
    %v196 = vld [vmem:[#allocation7 + $0x2c] sm:$0xf]
    %v197 = vld [vmem:[#allocation7 + $0x30] sm:$0xf]
    %v198 = vld [vmem:[#allocation7 + $0x34] sm:$0xf]
    %v199 = vld [vmem:[#allocation7 + $0x38] sm:$0xf]
    %v200 = vld [vmem:[#allocation7 + $0x3c] sm:$0xf]
    %v201 = vpack.c.bf16 %v184, %v183
    %v202 = vld [vmem:[%s4] sm:$0x1]
    %v204 = vlaneseq
    %v205 = vshrl.u32 %v204, 7
    %v206 = vsub.s32 0, %v205
    %v207 = vrot.slane %v202, %v206
    %v225 = vunpack.c.l.b16 %v185
    %v226 = vunpack.c.l.b16 %v186
    %v227 = vunpack.c.l.b16 %v187
    %v228 = vunpack.c.l.b16 %v188
    %v229 = vunpack.c.l.b16 %v189
    %v230 = vunpack.c.l.b16 %v190
    %v231 = vunpack.c.l.b16 %v191
    %v232 = vunpack.c.l.b16 %v192
    %v233 = vunpack.c.l.b16 %v193
    %v234 = vunpack.c.l.b16 %v194
    %v235 = vunpack.c.l.b16 %v195
    %v236 = vunpack.c.l.b16 %v196
    %v237 = vunpack.c.l.b16 %v197
    %v238 = vunpack.c.l.b16 %v198
    %v239 = vunpack.c.l.b16 %v199
    %v240 = vunpack.c.l.b16 %v200
    %v241 = vpack.c.b16 %v226, %v225
    %v242 = vpack.c.b16 %v228, %v227
    %v243 = vpack.c.b16 %v230, %v229
    %v244 = vpack.c.b16 %v232, %v231
    %v245 = vpack.c.b16 %v234, %v233
    %v246 = vpack.c.b16 %v236, %v235
    %v247 = vpack.c.b16 %v238, %v237
    %v248 = vpack.c.b16 %v240, %v239
    %257 = vmatprep.subr.bf16.mxu0 0
    %258 = vmatpush1.bf16.msra.mxu0 %v241
    %259 = vmatprep.subr.bf16.mxu0 0
    %260 = vmatpush1.bf16.msra.mxu0 %v242
    %261 = vmatprep.subr.bf16.mxu0 0
    %262 = vmatpush1.bf16.msra.mxu0 %v243
    %263 = vmatprep.subr.bf16.mxu0 0
    %264 = vmatpush1.bf16.msra.mxu0 %v244
    %265 = vmatprep.subr.bf16.mxu0 0
    %266 = vmatpush1.bf16.msra.mxu0 %v245
    %267 = vmatprep.subr.bf16.mxu0 0
    %268 = vmatpush1.bf16.msra.mxu0 %v246
    %269 = vmatprep.subr.bf16.mxu0 0
    %270 = vmatpush1.bf16.msra.mxu0 %v247
    %271 = vmatprep.subr.bf16.mxu0 0
    %272 = vmatpush1.bf16.msra.mxu0 %v248
    %273 = vmatprep.subr.bf16.mxu0 0
    %274 = vmatpush1.bf16.msra.mxu0 0
    %275 = vmatprep.subr.bf16.mxu0 0
    %276 = vmatpush1.bf16.msra.mxu0 0
    %277 = vmatprep.subr.bf16.mxu0 0
    %278 = vmatpush1.bf16.msra.mxu0 0
    %279 = vmatprep.subr.bf16.mxu0 0
    %280 = vmatpush1.bf16.msra.mxu0 0
    %281 = vmatprep.subr.bf16.mxu0 0
    %282 = vmatpush1.bf16.msra.mxu0 0
    %283 = vmatprep.subr.bf16.mxu0 0
    %284 = vmatpush1.bf16.msra.mxu0 0
    %285 = vmatprep.subr.bf16.mxu0 0
    %286 = vmatpush1.bf16.msra.mxu0 0
    %287 = vmatprep.subr.bf16.mxu0 0
    %288 = vmatpush1.bf16.msra.mxu0 0
    %289 = vmatprep.mubr.bf16.mxu0 0
    %290 = vmatmul.mubr.bf16.gmra.mrb[0].mxu0 %v201
    %v291 = vpop.f32.mrb[0].mxu0
    %v292 = vadd.f32 %v207, %v291
    %v293 = vpop.f32.mrb[0].mxu0
    %v294 = vpop.f32.mrb[0].mxu0
    %v295 = vadd.f32 %v207, %v294
    %v296 = vpop.f32.mrb[0].mxu0
    %297 = vdwg.mxu0
    %298 = vst [vmem:[#allocation8] sm:$0xff] %v292
    %299 = vst [vmem:[#allocation8 + $0x8] sm:$0xff] %v295
    // Predicated region
    $region34: #{tpu_custom_call.1} parent=1 // pred_check
      _
    $region35: #{tpu_custom_call.1} parent=1 // pred_check_branch
      %301 = sbr.rel (0) target = $region37
    $region36: #{tpu_custom_call.1} parent=1 // pred_region
      %s303 = ssub.s32 256, 256
      %304 = vsyncadd [#allocation4], %s303
      %s305 = sshll.u32 [#allocation8], 4
      %s306 = int_to_ptr.vmem [resolvable:$true] %s305
      %311 = dma.vmem_to_hbm [thread:$0]  %s306, 256, %s5, [#allocation4], 128, 128, 8
    $region37: #{tpu_custom_call.1} parent=1 // pred_fallthru
      _
    // Predicated region
    $region38: #{tpu_custom_call.1} parent=1 // pred_check
      _
    $region39: #{tpu_custom_call.1} parent=1 // pred_check_branch
      %313 = sbr.rel (0) target = $region41
    $region40: #{tpu_custom_call.1} parent=1 // pred_region
      %314 = dma.done [#allocation4], 256
    $region41: #{tpu_custom_call.1} parent=1 // pred_fallthru
      _
    %315 = vsyncpa [#allocation3], 1
    %316 = vsyncpa [#allocation6], 1
    %317 = vsyncpa [#allocation4], 1

</llo_original>
